<compile_context>
chip_gen: v7x
topology: tpu7x:2x2x1
jax: 0.10.0
libtpu: 0.0.40
codegen_flags: <defaults>
</compile_context>

<pallas_src>
import numpy as np
import jax
import jax.numpy as jnp
from jax.experimental import pallas as pl
from jax.experimental.pallas import tpu as pltpu

# deterministic "weights" of the loss terms (Objective/Constraint weights)
W_OBJ = 1.0
W_UB = 10.0
W_LB = 10.0
W_EQ = 100.0


def _round_up(x, m):
    return -(-x // m) * m


def _choose_tile_batch(B, N):
    """Pick a batch tile against a ~24 MiB double-buffered I/O VMEM budget."""
    # per batch row, double-buffered: 5 input cols + 2 outputs * 3N cols, f32
    per_row_io = 2 * (5 * N + 2 * 3 * N) * 4
    tb = (24 << 20) // per_row_io
    tb = max(8, (tb // 8) * 8)
    # keep >= ~4 grid steps on large batches for pipelining, but never shrink
    # below 256 rows/step just for pipeline depth (per-step overhead ~0.35us).
    tb = min(tb, max(256, _round_up(-(-B // 4), 8)))
    tb = min(tb, _round_up(B, 8))
    return tb


def _make_kernel(tb, n, b_true, apply_mask):
    """Build the per-tile kernel (tb, n, b_true, apply_mask are static)."""

    def kernel(z_ref, zref_ref, ub_ref, lb_ref, zt_ref,
               sums_ref, cval_ref, cviol_ref):
        i = pl.program_id(0)

        # resident (1, 2) accumulator: [sum(sq residual), sum(weighted viol)]
        @pl.when(i == 0)
        def _init():
            sums_ref[...] = jnp.zeros_like(sums_ref)

        z = z_ref[...]                                  # (tb, N)

        # ---- objective residual and constraint values / violations --------
        d = z - zref_ref[...]
        v1 = z - ub_ref[...]                            # ineq: z <= ub
        v2 = lb_ref[...] - z                            # ineq: z >= lb
        v3 = z - zt_ref[...]                            # eq  : z == z_tgt
        g1 = jnp.maximum(v1, 0.0)
        g2 = jnp.maximum(v2, 0.0)
        g3 = jnp.abs(v3)

        # ---- fused elementwise terms, one lane reduction each --------------
        sq = d * d
        pen = W_UB * g1 + W_LB * g2 + W_EQ * g3         # single weighted sum (VPU)

        row_sq = jnp.sum(sq, axis=1, keepdims=True)     # (tb, 1)
        row_pen = jnp.sum(pen, axis=1, keepdims=True)   # (tb, 1)

        if apply_mask:
            # ragged last tile: out-of-bounds rows hold unspecified data, so
            # mask the per-row sums with a NaN-safe select (not a multiply).
            rows = jax.lax.broadcasted_iota(jnp.int32, (tb, 1), 0) + i * tb
            valid = rows < b_true
            zero = jnp.zeros_like(row_sq)
            row_sq = jnp.where(valid, row_sq, zero)
            row_pen = jnp.where(valid, row_pen, zero)

        sums_ref[:, 0:1] += jnp.sum(row_sq, axis=0, keepdims=True)
        sums_ref[:, 1:2] += jnp.sum(row_pen, axis=0, keepdims=True)

        # ---- concatenated per-sample constraint values / violations --------
        # column offsets are lane-aligned because N % 128 == 0; out-of-bounds
        # rows of a ragged last tile are discarded by the clamped writeback.
        cval_ref[:, 0:n] = v1
        cval_ref[:, n:2 * n] = v2
        cval_ref[:, 2 * n:3 * n] = v3
        cviol_ref[:, 0:n] = g1
        cviol_ref[:, n:2 * n] = g2
        cviol_ref[:, 2 * n:3 * n] = g3

    return kernel


def penalty_loss_forward(input_dict, tile_batch=None):
    """JAX/Pallas equivalent of PenaltyLoss.forward for the synthetic problem."""
    z = input_dict["z"]
    zr = input_dict["z_ref"]
    ub = input_dict["ub"]
    lb = input_dict["lb"]
    zt = input_dict["z_target"]
    if ub.ndim == 1:
        ub = ub.reshape(1, -1)
    if lb.ndim == 1:
        lb = lb.reshape(1, -1)

    B, N = z.shape
    # TODO(synk): for N % 128 != 0 pad the feature axis (kept simple here).
    assert N % 128 == 0, "feature dim must be a multiple of 128 (lane width)"

    tb = _choose_tile_batch(B, N) if tile_batch is None else int(tile_batch)
    assert tb % 8 == 0, "batch tile must be a multiple of 8 (sublanes)"
    n_tiles = -(-B // tb)                    # cdiv grid; no input padding
    apply_mask = (B % tb) != 0               # ragged last tile -> row mask

    kernel = _make_kernel(tb, N, B, apply_mask)

    # VMEM estimate: double-buffered I/O columns + ~9 elementwise temporaries
    io_bytes = (5 * tb * N + 2 * 3 * tb * N + 2 * N + 2) * 4
    tmp_bytes = 9 * tb * N * 4
    want = 2 * io_bytes + tmp_bytes + (1 << 20)
    try:
        cap = (pltpu.get_tpu_info().vmem_capacity_bytes * 3) // 4
    except Exception:  # pragma: no cover - conservative fallback
        cap = 48 << 20
    vmem_limit = int(min(max(want, 8 << 20), cap))

    sums, cvals, cviols = pl.pallas_call(
        kernel,
        grid=(n_tiles,),
        out_shape=(
            jax.ShapeDtypeStruct((1, 2), jnp.float32),      # [obj_sum, pen_sum]
            jax.ShapeDtypeStruct((B, 3 * N), jnp.float32),  # C_values
            jax.ShapeDtypeStruct((B, 3 * N), jnp.float32),  # C_violations
        ),
        in_specs=[
            pl.BlockSpec((tb, N), lambda i: (i, 0)),   # z
            pl.BlockSpec((tb, N), lambda i: (i, 0)),   # z_ref
            pl.BlockSpec((1, N), lambda i: (0, 0)),    # ub (broadcast)
            pl.BlockSpec((1, N), lambda i: (0, 0)),    # lb (broadcast)
            pl.BlockSpec((tb, N), lambda i: (i, 0)),   # z_target
        ],
        out_specs=(
            # block == full array dims -> compliant; constant index -> resident
            # accumulator across the (sequential) grid, single final writeback.
            pl.BlockSpec((1, 2), lambda i: (0, 0)),
            pl.BlockSpec((tb, 3 * N), lambda i: (i, 0)),
            pl.BlockSpec((tb, 3 * N), lambda i: (i, 0)),
        ),
        compiler_params=pltpu.CompilerParams(
            dimension_semantics=("arbitrary",),   # carried scalar accumulator
            vmem_limit_bytes=vmem_limit,
        ),
    )(z, zr, ub, lb, zt)

    # final mean normalization (scalars only; no big-array post-processing)
    inv = 1.0 / float(B * N)
    obj = W_OBJ * sums[0, 0] * inv
    pen = sums[0, 1] * inv

    out = dict(input_dict)
    out["objective_loss"] = obj
    out["penalty_loss"] = pen
    out["loss"] = obj + pen
    out["C_values"] = cvals
    out["C_violations"] = cviols
    # constraint ordering is [ineq1 | ineq2 | eq] -> eq/ineq splits are static,
    # contiguous, layout-preserving slices (no boolean-mask gather).
    out["C_eq_values"] = cvals[:, 2 * N:]
    out["C_ineq_values"] = cvals[:, :2 * N]
    out["C_eq_violations"] = cviols[:, 2 * N:]
    out["C_ineq_violations"] = cviols[:, :2 * N]
    return out


def _reference(input_dict):
    """Pure-JAX reference of the same forward pass (for correctness check)."""
    z, zr = input_dict["z"], input_dict["z_ref"]
    ub, lb, zt = input_dict["ub"], input_dict["lb"], input_dict["z_target"]
    obj = W_OBJ * jnp.mean((z - zr) ** 2)
    v1, v2, v3 = z - ub, lb - z, z - zt
    g1, g2, g3 = jnp.maximum(v1, 0.0), jnp.maximum(v2, 0.0), jnp.abs(v3)
    pen = W_UB * jnp.mean(g1) + W_LB * jnp.mean(g2) + W_EQ * jnp.mean(g3)
    cvals = jnp.concatenate([v1, v2, v3], axis=-1)
    cviols = jnp.concatenate([g1, g2, g3], axis=-1)
    return obj, pen, obj + pen, cvals, cviols


def _check(input_dict, **kw):
    out = penalty_loss_forward(input_dict, **kw)
    jax.block_until_ready(out["loss"])
    obj_r, pen_r, loss_r, cvals_r, cviols_r = _reference(input_dict)
    np.testing.assert_allclose(np.asarray(out["objective_loss"]),
                               np.asarray(obj_r), rtol=1e-5, atol=1e-5)
    np.testing.assert_allclose(np.asarray(out["penalty_loss"]),
                               np.asarray(pen_r), rtol=1e-5, atol=1e-5)
    np.testing.assert_allclose(np.asarray(out["loss"]),
                               np.asarray(loss_r), rtol=1e-5, atol=1e-5)
    np.testing.assert_allclose(np.asarray(out["C_values"]),
                               np.asarray(cvals_r), rtol=1e-5, atol=1e-5)
    np.testing.assert_allclose(np.asarray(out["C_violations"]),
                               np.asarray(cviols_r), rtol=1e-5, atol=1e-5)
    B, N = input_dict["z"].shape
    assert out["C_eq_values"].shape == (B, N)
    assert out["C_ineq_values"].shape == (B, 2 * N)
    assert out["C_eq_violations"].shape == (B, N)
    assert out["C_ineq_violations"].shape == (B, 2 * N)
    return out


def _make_inputs(B, N, seed=0):
    key = jax.random.PRNGKey(seed)
    k1, k2, k3 = jax.random.split(key, 3)
    z = jax.random.normal(k1, (B, N), dtype=jnp.float32)
    z_ref = 0.1 * jax.random.normal(k2, (B, N), dtype=jnp.float32)
    z_target = 0.1 * jax.random.normal(k3, (B, N), dtype=jnp.float32)
    ub = jnp.full((1, N), 0.5, dtype=jnp.float32)
    lb = jnp.full((1, N), -0.5, dtype=jnp.float32)
    return {"z": z, "z_ref": z_ref, "ub": ub, "lb": lb, "z_target": z_target}


if __name__ == "__main__":
    # multi-tile grid with a ragged last tile (72 = 4*16 + 8): exercises the
    # cdiv grid, clamped output writeback and the NaN-safe row mask.
    _check(_make_inputs(72, 128), tile_batch=16)
    # evenly divided batch, auto tile selection (single tile, no mask path)
    _check(_make_inputs(64, 128))
    print("KERNEL_OK")
</pallas_src>

<mosaic_0001>
module attributes {stable_mosaic.version = 11 : i64} {
  func.func @kernel(%arg0: i32, %arg1: memref<16x128xf32, #tpu.memory_space<vmem>>, %arg2: memref<16x128xf32, #tpu.memory_space<vmem>>, %arg3: memref<1x128xf32, #tpu.memory_space<vmem>>, %arg4: memref<1x128xf32, #tpu.memory_space<vmem>>, %arg5: memref<16x128xf32, #tpu.memory_space<vmem>>, %arg6: memref<1x2xf32, #tpu.memory_space<vmem>>, %arg7: memref<16x384xf32, #tpu.memory_space<vmem>>, %arg8: memref<16x384xf32, #tpu.memory_space<vmem>>) attributes {dimension_semantics = [#tpu.dimension_semantics<arbitrary>], iteration_bounds = array<i64: 5>, scalar_prefetch = 0 : i64, scratch_operands = 0 : i64, tpu.core_type = #tpu.core_type<tc>, window_params = [{transform_indices = @transform_0, window_bounds = array<i64: 16, 128>}, {transform_indices = @transform_1, window_bounds = array<i64: 16, 128>}, {pipeline_mode = #tpu.pipeline_mode<synchronous>, transform_indices = @transform_2, window_bounds = array<i64: 1, 128>}, {pipeline_mode = #tpu.pipeline_mode<synchronous>, transform_indices = @transform_3, window_bounds = array<i64: 1, 128>}, {transform_indices = @transform_4, window_bounds = array<i64: 16, 128>}, {pipeline_mode = #tpu.pipeline_mode<synchronous>, transform_indices = @transform_5, window_bounds = array<i64: 1, 2>}, {transform_indices = @transform_6, window_bounds = array<i64: 16, 384>}, {transform_indices = @transform_7, window_bounds = array<i64: 16, 384>}]} {
    %c0_i32 = arith.constant 0 : i32
    %0 = arith.cmpi eq, %arg0, %c0_i32 : i32
    %1 = arith.extui %0 : i1 to i32
    %c0_i32_0 = arith.constant 0 : i32
    %2 = arith.cmpi ne, %1, %c0_i32_0 : i32
    scf.if %2 {
      %cst_36 = arith.constant 0.000000e+00 : f32
      %57 = vector.broadcast %cst_36 : f32 to vector<1x2xf32>
      %c0_37 = arith.constant 0 : index
      %c0_38 = arith.constant 0 : index
      %58 = vector.load %arg6[%c0_37, %c0_38] : memref<1x2xf32, #tpu.memory_space<vmem>>, vector<1x2xf32>
      tpu.vector_store %arg6[%c0_37, %c0_38], %57 {strides = array<i32>} : memref<1x2xf32, #tpu.memory_space<vmem>>, vector<1x2xf32>,
    } else {
    }
    %c0 = arith.constant 0 : index
    %c0_1 = arith.constant 0 : index
    %3 = vector.load %arg1[%c0, %c0_1] : memref<16x128xf32, #tpu.memory_space<vmem>>, vector<16x128xf32>
    %c0_2 = arith.constant 0 : index
    %c0_3 = arith.constant 0 : index
    %4 = vector.load %arg2[%c0_2, %c0_3] : memref<16x128xf32, #tpu.memory_space<vmem>>, vector<16x128xf32>
    %5 = arith.subf %3, %4 : vector<16x128xf32>
    %c0_4 = arith.constant 0 : index
    %c0_5 = arith.constant 0 : index
    %6 = vector.load %arg3[%c0_4, %c0_5] : memref<1x128xf32, #tpu.memory_space<vmem>>, vector<1x128xf32>
    %7 = vector.broadcast %6 : vector<1x128xf32> to vector<16x128xf32>
    %8 = arith.subf %3, %7 : vector<16x128xf32>
    %c0_6 = arith.constant 0 : index
    %c0_7 = arith.constant 0 : index
    %9 = vector.load %arg4[%c0_6, %c0_7] : memref<1x128xf32, #tpu.memory_space<vmem>>, vector<1x128xf32>
    %10 = vector.broadcast %9 : vector<1x128xf32> to vector<16x128xf32>
    %11 = arith.subf %10, %3 : vector<16x128xf32>
    %c0_8 = arith.constant 0 : index
    %c0_9 = arith.constant 0 : index
    %12 = vector.load %arg5[%c0_8, %c0_9] : memref<16x128xf32, #tpu.memory_space<vmem>>, vector<16x128xf32>
    %13 = arith.subf %3, %12 : vector<16x128xf32>
    %cst = arith.constant 0.000000e+00 : f32
    %14 = vector.broadcast %cst : f32 to vector<16x128xf32>
    %15 = arith.maximumf %8, %14 : vector<16x128xf32>
    %cst_10 = arith.constant 0.000000e+00 : f32
    %16 = vector.broadcast %cst_10 : f32 to vector<16x128xf32>
    %17 = arith.maximumf %11, %16 : vector<16x128xf32>
    %18 = math.absf %13 : vector<16x128xf32>
    %19 = arith.mulf %5, %5 : vector<16x128xf32>
    %cst_11 = arith.constant 1.000000e+01 : f32
    %20 = vector.broadcast %cst_11 : f32 to vector<16x128xf32>
    %21 = arith.mulf %20, %15 : vector<16x128xf32>
    %cst_12 = arith.constant 1.000000e+01 : f32
    %22 = vector.broadcast %cst_12 : f32 to vector<16x128xf32>
    %23 = arith.mulf %22, %17 : vector<16x128xf32>
    %24 = arith.addf %21, %23 : vector<16x128xf32>
    %cst_13 = arith.constant 1.000000e+02 : f32
    %25 = vector.broadcast %cst_13 : f32 to vector<16x128xf32>
    %26 = arith.mulf %25, %18 : vector<16x128xf32>
    %27 = arith.addf %24, %26 : vector<16x128xf32>
    %cst_14 = arith.constant dense<0.000000e+00> : vector<16xf32>
    %28 = vector.multi_reduction <add>, %19, %cst_14 [1] : vector<16x128xf32> to vector<16xf32>
    %29 = vector.shape_cast %28 : vector<16xf32> to vector<16x1xf32>
    %cst_15 = arith.constant dense<0.000000e+00> : vector<16xf32>
    %30 = vector.multi_reduction <add>, %27, %cst_15 [1] : vector<16x128xf32> to vector<16xf32>
    %31 = vector.shape_cast %30 : vector<16xf32> to vector<16x1xf32>
    %32 = tpu.iota {dimensions = array<i32: 0>} : vector<16x1xi32>
    %c16_i32 = arith.constant 16 : i32
    %33 = arith.muli %arg0, %c16_i32 : i32
    %34 = vector.broadcast %33 : i32 to vector<16x1xi32>
    %35 = arith.addi %32, %34 : vector<16x1xi32>
    %c72_i32 = arith.constant 72 : i32
    %36 = vector.broadcast %c72_i32 : i32 to vector<16x1xi32>
    %37 = arith.cmpi slt, %35, %36 : vector<16x1xi32>
    %cst_16 = arith.constant 0.000000e+00 : f32
    %38 = vector.broadcast %cst_16 : f32 to vector<16x1xf32>
    %39 = arith.select %37, %29, %38 : vector<16x1xi1>, vector<16x1xf32>
    %40 = arith.select %37, %31, %38 : vector<16x1xi1>, vector<16x1xf32>
    %c0_17 = arith.constant 0 : index
    %c0_18 = arith.constant 0 : index
    %41 = vector.load %arg6[%c0_17, %c0_18] : memref<1x2xf32, #tpu.memory_space<vmem>>, vector<1x1xf32>
    %cst_19 = arith.constant dense<0.000000e+00> : vector<1xf32>
    %42 = vector.multi_reduction <add>, %39, %cst_19 [0] : vector<16x1xf32> to vector<1xf32>
    %43 = vector.shape_cast %42 : vector<1xf32> to vector<1x1xf32>
    %44 = arith.addf %41, %43 : vector<1x1xf32>
    %c0_20 = arith.constant 0 : index
    %c0_21 = arith.constant 0 : index
    %45 = vector.load %arg6[%c0_20, %c0_21] : memref<1x2xf32, #tpu.memory_space<vmem>>, vector<1x1xf32>
    tpu.vector_store %arg6[%c0_20, %c0_21], %44 {strides = array<i32>} : memref<1x2xf32, #tpu.memory_space<vmem>>, vector<1x1xf32>,
    %c0_22 = arith.constant 0 : index
    %c1 = arith.constant 1 : index
    %46 = vector.load %arg6[%c0_22, %c1] : memref<1x2xf32, #tpu.memory_space<vmem>>, vector<1x1xf32>
    %cst_23 = arith.constant dense<0.000000e+00> : vector<1xf32>
    %47 = vector.multi_reduction <add>, %40, %cst_23 [0] : vector<16x1xf32> to vector<1xf32>
    %48 = vector.shape_cast %47 : vector<1xf32> to vector<1x1xf32>
    %49 = arith.addf %46, %48 : vector<1x1xf32>
    %c0_24 = arith.constant 0 : index
    %c1_25 = arith.constant 1 : index
    %50 = vector.load %arg6[%c0_24, %c1_25] : memref<1x2xf32, #tpu.memory_space<vmem>>, vector<1x1xf32>
    tpu.vector_store %arg6[%c0_24, %c1_25], %49 {strides = array<i32>} : memref<1x2xf32, #tpu.memory_space<vmem>>, vector<1x1xf32>,
    %c0_26 = arith.constant 0 : index
    %c0_27 = arith.constant 0 : index
    %51 = vector.load %arg7[%c0_26, %c0_27] : memref<16x384xf32, #tpu.memory_space<vmem>>, vector<16x128xf32>
    tpu.vector_store %arg7[%c0_26, %c0_27], %8 {strides = array<i32>} : memref<16x384xf32, #tpu.memory_space<vmem>>, vector<16x128xf32>,
    %c0_28 = arith.constant 0 : index
    %c128 = arith.constant 128 : index
    %52 = vector.load %arg7[%c0_28, %c128] : memref<16x384xf32, #tpu.memory_space<vmem>>, vector<16x128xf32>
    tpu.vector_store %arg7[%c0_28, %c128], %11 {strides = array<i32>} : memref<16x384xf32, #tpu.memory_space<vmem>>, vector<16x128xf32>,
    %c0_29 = arith.constant 0 : index
    %c256 = arith.constant 256 : index
    %53 = vector.load %arg7[%c0_29, %c256] : memref<16x384xf32, #tpu.memory_space<vmem>>, vector<16x128xf32>
    tpu.vector_store %arg7[%c0_29, %c256], %13 {strides = array<i32>} : memref<16x384xf32, #tpu.memory_space<vmem>>, vector<16x128xf32>,
    %c0_30 = arith.constant 0 : index
    %c0_31 = arith.constant 0 : index
    %54 = vector.load %arg8[%c0_30, %c0_31] : memref<16x384xf32, #tpu.memory_space<vmem>>, vector<16x128xf32>
    tpu.vector_store %arg8[%c0_30, %c0_31], %15 {strides = array<i32>} : memref<16x384xf32, #tpu.memory_space<vmem>>, vector<16x128xf32>,
    %c0_32 = arith.constant 0 : index
    %c128_33 = arith.constant 128 : index
    %55 = vector.load %arg8[%c0_32, %c128_33] : memref<16x384xf32, #tpu.memory_space<vmem>>, vector<16x128xf32>
    tpu.vector_store %arg8[%c0_32, %c128_33], %17 {strides = array<i32>} : memref<16x384xf32, #tpu.memory_space<vmem>>, vector<16x128xf32>,
    %c0_34 = arith.constant 0 : index
    %c256_35 = arith.constant 256 : index
    %56 = vector.load %arg8[%c0_34, %c256_35] : memref<16x384xf32, #tpu.memory_space<vmem>>, vector<16x128xf32>
    tpu.vector_store %arg8[%c0_34, %c256_35], %18 {strides = array<i32>} : memref<16x384xf32, #tpu.memory_space<vmem>>, vector<16x128xf32>,
    return
  }
  func.func @transform_0(%arg0: i32) -> (i32, i32) {
    %c0_i32 = arith.constant 0 : i32
    %c0_i32_0 = arith.constant 0 : i32
    return %arg0, %c0_i32 : i32, i32
  }
  func.func @transform_1(%arg0: i32) -> (i32, i32) {
    %c0_i32 = arith.constant 0 : i32
    %c0_i32_0 = arith.constant 0 : i32
    return %arg0, %c0_i32 : i32, i32
  }
  func.func @transform_2(%arg0: i32) -> (i32, i32) {
    %c0_i32 = arith.constant 0 : i32
    %c0_i32_0 = arith.constant 0 : i32
    %c0_i32_1 = arith.constant 0 : i32
    return %c0_i32, %c0_i32_0 : i32, i32
  }
  func.func @transform_3(%arg0: i32) -> (i32, i32) {
    %c0_i32 = arith.constant 0 : i32
    %c0_i32_0 = arith.constant 0 : i32
    %c0_i32_1 = arith.constant 0 : i32
    return %c0_i32, %c0_i32_0 : i32, i32
  }
  func.func @transform_4(%arg0: i32) -> (i32, i32) {
    %c0_i32 = arith.constant 0 : i32
    %c0_i32_0 = arith.constant 0 : i32
    return %arg0, %c0_i32 : i32, i32
  }
  func.func @transform_5(%arg0: i32) -> (i32, i32) {
    %c0_i32 = arith.constant 0 : i32
    %c0_i32_0 = arith.constant 0 : i32
    %c0_i32_1 = arith.constant 0 : i32
    return %c0_i32, %c0_i32_0 : i32, i32
  }
  func.func @transform_6(%arg0: i32) -> (i32, i32) {
    %c0_i32 = arith.constant 0 : i32
    %c0_i32_0 = arith.constant 0 : i32
    return %arg0, %c0_i32 : i32, i32
  }
  func.func @transform_7(%arg0: i32) -> (i32, i32) {
    %c0_i32 = arith.constant 0 : i32
    %c0_i32_0 = arith.constant 0 : i32
    return %arg0, %c0_i32 : i32, i32
  }
}

</mosaic_0001>

<llo_original>
// kernel: tpu_custom_call.1
$region0: #{tpu_custom_call.1}
  #allocation0 [shape = 'u32[]', space=smem, size = 0x4, offset = 0x4, fixed_abs, tag = 'smem constant byte address 0x4 - core index']
  #allocation1 [shape = 'u32[144,128]{1,0:T(1,128)}', space=vmem, size = 0x12000, scoped, tag = 'internal scratch']
  %s0 = inlined_call_operand.hbm [shape: f32[72,128], index: 0, kind: input, shape index: {}]
  %s1 = inlined_call_operand.hbm [shape: f32[72,128], index: 1, kind: input, shape index: {}]
  %s2 = inlined_call_operand.vmem [shape: f32[1,128], index: 2, kind: input, shape index: {}]
  %s3 = inlined_call_operand.vmem [shape: f32[1,128], index: 3, kind: input, shape index: {}]
  %s4 = inlined_call_operand.hbm [shape: f32[72,128], index: 4, kind: input, shape index: {}]
  %s5 = inlined_call_operand.hbm [shape: f32[1,2], index: 5, kind: output, shape index: {0}]
  %s6 = inlined_call_operand.hbm [shape: f32[72,384], index: 6, kind: output, shape index: {1}]
  %s7 = inlined_call_operand.hbm [shape: f32[72,384], index: 7, kind: output, shape index: {2}]
  %8 = xla_tuple %s5, %s6, %s7
  %s9 = sld [smem:[#allocation0]]
  $region85: #{tpu_custom_call.1} parent=0
    _
  %s11 = ssub.s32 1, %s9
  %s12 = scalar_select 0, %s11, %s9
  $region1: #{tpu_custom_call.1} parent=0
    #allocation2 [shape = 'u8[16384]{0}', space=vmem, size = 0x4000, scoped, tag = 'input window, operand 0']
    #allocation3 [shape = 's32[2]{0}', space=sflag, size = 0x8, scoped, tag = 'scoped memory for tpu_custom_call.1']
    #allocation4 [shape = 's32[2]{0}', space=sflag, size = 0x8, scoped, tag = 'scoped memory for tpu_custom_call.1']
    #allocation5 [shape = 'u8[16384]{0}', space=vmem, size = 0x4000, scoped, tag = 'input window, operand 1']
    #allocation6 [shape = 's32[2]{0}', space=sflag, size = 0x8, scoped, tag = 'scoped memory for tpu_custom_call.1']
    #allocation7 [shape = 'u8[16384]{0}', space=vmem, size = 0x4000, scoped, tag = 'input window, operand 4']
    #allocation8 [shape = 'u8[512]{0}', space=vmem, size = 0x400, scoped, tag = 'output window, operand 0, single buffered']
    #allocation9 [shape = 'u8[49152]{0}', space=vmem, size = 0xc000, scoped, tag = 'output window, operand 1']
    #allocation10 [shape = 's32[2]{0}', space=sflag, size = 0x8, scoped, tag = 'scoped memory for tpu_custom_call.1']
    #allocation11 [shape = 'u8[49152]{0}', space=vmem, size = 0xc000, scoped, tag = 'output window, operand 2']
    %13 = vsyncpa [#allocation3], 0
    %s14 = scalar_lea.sflag [#allocation3], 1
    %15 = vsyncpa %s14, 0
    %16 = vsyncpa [#allocation6], 0
    %s17 = scalar_lea.sflag [#allocation6], 1
    %18 = vsyncpa %s17, 0
    %19 = vsyncpa [#allocation4], 0
    %20 = vsyncpa [#allocation10], 0
    %s21 = scalar_lea.sflag [#allocation10], 1
    %22 = vsyncpa %s21, 0
    loop: start=0, step=1, limit=7
    $region2: #{tpu_custom_call.1} parent=1 // loop_pre_header
      _
    $region3: #{tpu_custom_call.1} parent=1 // loop_header
      %s24 = sphi 0, %s28
      %p25 = scmp.ge.s32.totalorder %s24, 7
      %s34 = sphi 0, %s36
      %s37 = sphi 0, %s34
      %s38 = sphi 0, %s37
      %s54 = sphi 0, %s38
      %s60 = sphi 0, %s62
      %s63 = sphi 0, %s60
      %s64 = sphi 0, %s63
      %s80 = sphi 0, %s64
      %s84 = sphi 0, %s84
      %s86 = sphi 0, %s84
      %s87 = sphi 0, %s86
      %s101 = sphi 0, %s87
      %s105 = sphi 0, %s105
      %s107 = sphi 0, %s105
      %s108 = sphi 0, %s107
      %s122 = sphi 0, %s108
      %s128 = sphi 0, %s130
      %s131 = sphi 0, %s128
      %s132 = sphi 0, %s131
      %s148 = sphi 0, %s132
      %s152 = sphi 0, %s152
      %s154 = sphi 0, %s152
      %s155 = sphi 0, %s154
      %s169 = sphi 0, %s155
      %s175 = sphi 0, %s177
      %s178 = sphi 0, %s175
      %s179 = sphi 0, %s178
      %s195 = sphi 0, %s179
      %s201 = sphi 0, %s203
      %s204 = sphi 0, %s201
      %s205 = sphi 0, %s204
      %s221 = sphi 0, %s205
    $region4: #{tpu_custom_call.1} parent=1 // loop_header_branch
      %27 = sbr.rel (%p25) target = $region8
    $region5: #{tpu_custom_call.1} parent=1 // loop_body
      %s29 = ssub.s32 %s24, 1
      %s30 = ssub.s32 %s24, 2
      %s31 = sadd.s32 %s24, 1
      %s32 = ssub.s32 %s24, %s31
      %p33 = scmp.eq.s32.totalorder %s32, 0
      %s35 = sadd.s32 %s34, 1
      %s36 = scalar_select %p33, %s34, %s35
      %p39 = pneg %p33
      %p40 = scmp.eq.s32.totalorder %s24, 4
      %p41 = por %p39, %p40
      %p42 = scmp.ne.s32.totalorder %s34, %s37
      %p43 = scmp.eq.s32.totalorder %s24, 0
      %p44 = por %p42, %p43
      %p45 = scmp.ne.s32.totalorder %s34, %s37
      %p46 = scmp.eq.s32.totalorder %s29, 4
      %p47 = por %p45, %p46
      %p48 = scmp.ne.s32.totalorder %s37, %s38
      %p49 = scmp.eq.s32.totalorder %s29, 0
      %p50 = por %p48, %p49
      %p51 = scmp.ne.s32.totalorder %s37, %s38
      %p52 = scmp.eq.s32.totalorder %s30, 4
      %p53 = por %p51, %p52
      %p55 = scmp.ne.s32.totalorder %s38, %s54
      %p56 = scmp.eq.s32.totalorder %s30, 0
      %p57 = por %p55, %p56
      %s58 = ssub.s32 %s24, %s31
      %p59 = scmp.eq.s32.totalorder %s58, 0
      %s61 = sadd.s32 %s60, 1
      %s62 = scalar_select %p59, %s60, %s61
      %p65 = pneg %p59
      %p66 = scmp.eq.s32.totalorder %s24, 4
      %p67 = por %p65, %p66
      %p68 = scmp.ne.s32.totalorder %s60, %s63
      %p69 = scmp.eq.s32.totalorder %s24, 0
      %p70 = por %p68, %p69
      %p71 = scmp.ne.s32.totalorder %s60, %s63
      %p72 = scmp.eq.s32.totalorder %s29, 4
      %p73 = por %p71, %p72
      %p74 = scmp.ne.s32.totalorder %s63, %s64
      %p75 = scmp.eq.s32.totalorder %s29, 0
      %p76 = por %p74, %p75
      %p77 = scmp.ne.s32.totalorder %s63, %s64
      %p78 = scmp.eq.s32.totalorder %s30, 4
      %p79 = por %p77, %p78
      %p81 = scmp.ne.s32.totalorder %s64, %s80
      %p82 = scmp.eq.s32.totalorder %s30, 0
      %p83 = por %p81, %p82
      %s85 = sadd.s32 %s84, 1
      %p88 = scmp.eq.s32.totalorder %s24, 4
      %p89 = scmp.ne.s32.totalorder %s84, %s86
      %p90 = scmp.eq.s32.totalorder %s24, 0
      %p91 = por %p89, %p90
      %p92 = scmp.ne.s32.totalorder %s84, %s86
      %p93 = scmp.eq.s32.totalorder %s29, 4
      %p94 = por %p92, %p93
      %p95 = scmp.ne.s32.totalorder %s86, %s87
      %p96 = scmp.eq.s32.totalorder %s29, 0
      %p97 = por %p95, %p96
      %p98 = scmp.ne.s32.totalorder %s86, %s87
      %p99 = scmp.eq.s32.totalorder %s30, 4
      %p100 = por %p98, %p99
      %p102 = scmp.ne.s32.totalorder %s87, %s101
      %p103 = scmp.eq.s32.totalorder %s30, 0
      %p104 = por %p102, %p103
      %s106 = sadd.s32 %s105, 1
      %p109 = scmp.eq.s32.totalorder %s24, 4
      %p110 = scmp.ne.s32.totalorder %s105, %s107
      %p111 = scmp.eq.s32.totalorder %s24, 0
      %p112 = por %p110, %p111
      %p113 = scmp.ne.s32.totalorder %s105, %s107
      %p114 = scmp.eq.s32.totalorder %s29, 4
      %p115 = por %p113, %p114
      %p116 = scmp.ne.s32.totalorder %s107, %s108
      %p117 = scmp.eq.s32.totalorder %s29, 0
      %p118 = por %p116, %p117
      %p119 = scmp.ne.s32.totalorder %s107, %s108
      %p120 = scmp.eq.s32.totalorder %s30, 4
      %p121 = por %p119, %p120
      %p123 = scmp.ne.s32.totalorder %s108, %s122
      %p124 = scmp.eq.s32.totalorder %s30, 0
      %p125 = por %p123, %p124
      %s126 = ssub.s32 %s24, %s31
      %p127 = scmp.eq.s32.totalorder %s126, 0
      %s129 = sadd.s32 %s128, 1
      %s130 = scalar_select %p127, %s128, %s129
      %p133 = pneg %p127
      %p134 = scmp.eq.s32.totalorder %s24, 4
      %p135 = por %p133, %p134
      %p136 = scmp.ne.s32.totalorder %s128, %s131
      %p137 = scmp.eq.s32.totalorder %s24, 0
      %p138 = por %p136, %p137
      %p139 = scmp.ne.s32.totalorder %s128, %s131
      %p140 = scmp.eq.s32.totalorder %s29, 4
      %p141 = por %p139, %p140
      %p142 = scmp.ne.s32.totalorder %s131, %s132
      %p143 = scmp.eq.s32.totalorder %s29, 0
      %p144 = por %p142, %p143
      %p145 = scmp.ne.s32.totalorder %s131, %s132
      %p146 = scmp.eq.s32.totalorder %s30, 4
      %p147 = por %p145, %p146
      %p149 = scmp.ne.s32.totalorder %s132, %s148
      %p150 = scmp.eq.s32.totalorder %s30, 0
      %p151 = por %p149, %p150
      %s153 = sadd.s32 %s152, 1
      %p156 = scmp.eq.s32.totalorder %s24, 4
      %p157 = scmp.ne.s32.totalorder %s152, %s154
      %p158 = scmp.eq.s32.totalorder %s24, 0
      %p159 = por %p157, %p158
      %p160 = scmp.ne.s32.totalorder %s152, %s154
      %p161 = scmp.eq.s32.totalorder %s29, 4
      %p162 = por %p160, %p161
      %p163 = scmp.ne.s32.totalorder %s154, %s155
      %p164 = scmp.eq.s32.totalorder %s29, 0
      %p165 = por %p163, %p164
      %p166 = scmp.ne.s32.totalorder %s154, %s155
      %p167 = scmp.eq.s32.totalorder %s30, 4
      %p168 = por %p166, %p167
      %p170 = scmp.ne.s32.totalorder %s155, %s169
      %p171 = scmp.eq.s32.totalorder %s30, 0
      %p172 = por %p170, %p171
      %s173 = ssub.s32 %s24, %s31
      %p174 = scmp.eq.s32.totalorder %s173, 0
      %s176 = sadd.s32 %s175, 1
      %s177 = scalar_select %p174, %s175, %s176
      %p180 = pneg %p174
      %p181 = scmp.eq.s32.totalorder %s24, 4
      %p182 = por %p180, %p181
      %p183 = scmp.ne.s32.totalorder %s175, %s178
      %p184 = scmp.eq.s32.totalorder %s24, 0
      %p185 = por %p183, %p184
      %p186 = scmp.ne.s32.totalorder %s175, %s178
      %p187 = scmp.eq.s32.totalorder %s29, 4
      %p188 = por %p186, %p187
      %p189 = scmp.ne.s32.totalorder %s178, %s179
      %p190 = scmp.eq.s32.totalorder %s29, 0
      %p191 = por %p189, %p190
      %p192 = scmp.ne.s32.totalorder %s178, %s179
      %p193 = scmp.eq.s32.totalorder %s30, 4
      %p194 = por %p192, %p193
      %p196 = scmp.ne.s32.totalorder %s179, %s195
      %p197 = scmp.eq.s32.totalorder %s30, 0
      %p198 = por %p196, %p197
      %s199 = ssub.s32 %s24, %s31
      %p200 = scmp.eq.s32.totalorder %s199, 0
      %s202 = sadd.s32 %s201, 1
      %s203 = scalar_select %p200, %s201, %s202
      %p206 = pneg %p200
      %p207 = scmp.eq.s32.totalorder %s24, 4
      %p208 = por %p206, %p207
      %p209 = scmp.ne.s32.totalorder %s201, %s204
      %p210 = scmp.eq.s32.totalorder %s24, 0
      %p211 = por %p209, %p210
      %p212 = scmp.ne.s32.totalorder %s201, %s204
      %p213 = scmp.eq.s32.totalorder %s29, 4
      %p214 = por %p212, %p213
      %p215 = scmp.ne.s32.totalorder %s204, %s205
      %p216 = scmp.eq.s32.totalorder %s29, 0
      %p217 = por %p215, %p216
      %p218 = scmp.ne.s32.totalorder %s204, %s205
      %p219 = scmp.eq.s32.totalorder %s30, 4
      %p220 = por %p218, %p219
      %p222 = scmp.ne.s32.totalorder %s205, %s221
      %p223 = scmp.eq.s32.totalorder %s30, 0
      %p224 = por %p222, %p223
      %p225 = scmp.le.s32.totalorder 1, %s24
      %p226 = scmp.lt.s32.totalorder %s24, 6
      %p227 = pnand %p225, %p226
      %p228 = pneg %p227
      // Predicated region
      $region9: #{tpu_custom_call.1} parent=5 // pred_check
        _
      $region10: #{tpu_custom_call.1} parent=5 // pred_check_branch
        %230 = sbr.rel (%p227) target = $region12
      $region11: #{tpu_custom_call.1} parent=5 // pred_region
        %s231 = ssub.s32 %s24, 1
        // Predicated region
        $region13: #{tpu_custom_call.1} parent=11 // pred_check
          %p232 = pneg %p97
        $region14: #{tpu_custom_call.1} parent=11 // pred_check_branch
          %234 = sbr.rel (%p232) target = $region16
        $region15: #{tpu_custom_call.1} parent=11 // pred_region
          _
        $region16: #{tpu_custom_call.1} parent=11 // pred_fallthru
          _
        // Predicated region
        $region17: #{tpu_custom_call.1} parent=11 // pred_check
          %p235 = pneg %p118
        $region18: #{tpu_custom_call.1} parent=11 // pred_check_branch
          %237 = sbr.rel (%p235) target = $region20
        $region19: #{tpu_custom_call.1} parent=11 // pred_region
          _
        $region20: #{tpu_custom_call.1} parent=11 // pred_fallthru
          _
      $region12: #{tpu_custom_call.1} parent=5 // pred_fallthru
        _
      %p238 = scmp.lt.s32.totalorder %s24, 5
      // Predicated region
      $region21: #{tpu_custom_call.1} parent=5 // pred_check
        %p239 = pneg %p238
      $region22: #{tpu_custom_call.1} parent=5 // pred_check_branch
        %241 = sbr.rel (%p239) target = $region24
      $region23: #{tpu_custom_call.1} parent=5 // pred_region
        // Predicated region
        $region25: #{tpu_custom_call.1} parent=23 // pred_check
          %p242 = pneg %p44
        $region26: #{tpu_custom_call.1} parent=23 // pred_check_branch
          %244 = sbr.rel (%p242) target = $region28
        $region27: #{tpu_custom_call.1} parent=23 // pred_region
          %s245 = sand.u32 %s34, 1
          %s246 = scalar_lea.sflag [#allocation3], %s245
          %s247 = sand.u32 %s34, 1
          %s248 = smul.addr %s247, 16
          %s249 = scalar_lea.vmem [#allocation2], %s248
          %s250 = smul.u32 2, %s24
          %s251 = ssub.s32 9, %s250
          %p252 = scmp.lt.s32.totalorder %s251, 2
          %s253 = scalar_select %p252, %s251, 2
          %s254 = smul.u32 128, %s253
          %s256 = ssub.s32 256, %s254
          %257 = vsyncadd %s246, %s256
          %p258 = scmp.ne.s32.totalorder 0, %s254
          %s259 = smul.addr %s250, 128
          %s260 = scalar_lea.hbm %s0, %s259
          %s261 = smul.u32 8, %s253
          %s262 = sshll.u32 %s249, 4
          %s263 = int_to_ptr.vmem [resolvable:$true] %s262
          %s264 = sshll.u32 %s261, 4
          %268 = dma.hbm_to_vmem [thread:$0]  (%p258), %s260, %s264, %s263, %s246, 128, 128, 8
        $region28: #{tpu_custom_call.1} parent=23 // pred_fallthru
          _
        // Predicated region
        $region29: #{tpu_custom_call.1} parent=23 // pred_check
          %p269 = pneg %p70
        $region30: #{tpu_custom_call.1} parent=23 // pred_check_branch
          %271 = sbr.rel (%p269) target = $region32
        $region31: #{tpu_custom_call.1} parent=23 // pred_region
          %s272 = sand.u32 %s24, 1
          %s273 = scalar_lea.sflag [#allocation6], %s272
          %s274 = sand.u32 %s60, 1
          %s275 = smul.addr %s274, 16
          %s276 = scalar_lea.vmem [#allocation5], %s275
          %s277 = smul.u32 2, %s24
          %s278 = ssub.s32 9, %s277
          %p279 = scmp.lt.s32.totalorder %s278, 2
          %s280 = scalar_select %p279, %s278, 2
          %s281 = smul.u32 128, %s280
          %s283 = ssub.s32 256, %s281
          %284 = vsyncadd %s273, %s283
          %p285 = scmp.ne.s32.totalorder 0, %s281
          %s286 = smul.addr %s277, 128
          %s287 = scalar_lea.hbm %s1, %s286
          %s288 = smul.u32 8, %s280
          %s289 = sshll.u32 %s276, 4
          %s290 = int_to_ptr.vmem [resolvable:$true] %s289
          %s291 = sshll.u32 %s288, 4
          %295 = dma.hbm_to_vmem [thread:$0]  (%p285), %s287, %s291, %s290, %s273, 128, 128, 8
        $region32: #{tpu_custom_call.1} parent=23 // pred_fallthru
          _
        // Predicated region
        $region33: #{tpu_custom_call.1} parent=23 // pred_check
          %p296 = pneg %p138
        $region34: #{tpu_custom_call.1} parent=23 // pred_check_branch
          %298 = sbr.rel (%p296) target = $region36
        $region35: #{tpu_custom_call.1} parent=23 // pred_region
          %s299 = sand.u32 %s24, 1
          %s300 = scalar_lea.sflag [#allocation6], %s299
          %s301 = sand.u32 %s128, 1
          %s302 = smul.addr %s301, 16
          %s303 = scalar_lea.vmem [#allocation7], %s302
          %s304 = smul.u32 2, %s24
          %s305 = ssub.s32 9, %s304
          %p306 = scmp.lt.s32.totalorder %s305, 2
          %s307 = scalar_select %p306, %s305, 2
          %s308 = smul.u32 128, %s307
          %s310 = ssub.s32 256, %s308
          %311 = vsyncadd %s300, %s310
          %p312 = scmp.ne.s32.totalorder 0, %s308
          %s313 = smul.addr %s304, 128
          %s314 = scalar_lea.hbm %s4, %s313
          %s315 = smul.u32 8, %s307
          %s316 = sshll.u32 %s303, 4
          %s317 = int_to_ptr.vmem [resolvable:$true] %s316
          %s318 = sshll.u32 %s315, 4
          %322 = dma.hbm_to_vmem [thread:$0]  (%p312), %s314, %s318, %s317, %s300, 128, 128, 8
        $region36: #{tpu_custom_call.1} parent=23 // pred_fallthru
          _
      $region24: #{tpu_custom_call.1} parent=5 // pred_fallthru
        _
      %p323 = scmp.le.s32.totalorder 1, %s24
      %p324 = scmp.lt.s32.totalorder %s24, 6
      %p325 = pnand %p323, %p324
      %p326 = pneg %p325
      // Predicated region
      $region37: #{tpu_custom_call.1} parent=5 // pred_check
        _
      $region38: #{tpu_custom_call.1} parent=5 // pred_check_branch
        %328 = sbr.rel (%p325) target = $region40
      $region39: #{tpu_custom_call.1} parent=5 // pred_region
        %s329 = ssub.s32 %s24, 1
        %s330 = sand.u32 %s37, 1
        %s331 = scalar_lea.sflag [#allocation3], %s330
        %s332 = sand.u32 %s37, 1
        %s333 = smul.addr %s332, 16
        %s334 = scalar_lea.vmem [#allocation2], %s333
        // Predicated region
        $region41: #{tpu_custom_call.1} parent=39 // pred_check
          %p335 = pneg %p50
        $region42: #{tpu_custom_call.1} parent=39 // pred_check_branch
          %337 = sbr.rel (%p335) target = $region44
        $region43: #{tpu_custom_call.1} parent=39 // pred_region
          %338 = dma.done %s331, 256
        $region44: #{tpu_custom_call.1} parent=39 // pred_fallthru
          _
        %s339 = sand.u32 %s29, 1
        %s340 = scalar_lea.sflag [#allocation6], %s339
        %s341 = sand.u32 %s63, 1
        %s342 = smul.addr %s341, 16
        %s343 = scalar_lea.vmem [#allocation5], %s342
        // Predicated region
        $region45: #{tpu_custom_call.1} parent=39 // pred_check
          %p344 = pneg %p76
        $region46: #{tpu_custom_call.1} parent=39 // pred_check_branch
          %346 = sbr.rel (%p344) target = $region48
        $region47: #{tpu_custom_call.1} parent=39 // pred_region
          %347 = dma.done %s340, 256
        $region48: #{tpu_custom_call.1} parent=39 // pred_fallthru
          _
        %s348 = sand.u32 %s29, 1
        %s349 = scalar_lea.sflag [#allocation6], %s348
        %s350 = sand.u32 %s131, 1
        %s351 = smul.addr %s350, 16
        %s352 = scalar_lea.vmem [#allocation7], %s351
        // Predicated region
        $region49: #{tpu_custom_call.1} parent=39 // pred_check
          %p353 = pneg %p144
        $region50: #{tpu_custom_call.1} parent=39 // pred_check_branch
          %355 = sbr.rel (%p353) target = $region52
        $region51: #{tpu_custom_call.1} parent=39 // pred_region
          %356 = dma.done %s349, 256
        $region52: #{tpu_custom_call.1} parent=39 // pred_fallthru
          _
        %s357 = sand.u32 %s37, 1
        %s358 = scalar_lea.sflag [#allocation3], %s357
        %s359 = sand.u32 %s37, 1
        %s360 = smul.addr %s359, 16
        %s361 = scalar_lea.vmem [#allocation2], %s360
        %p362 = pneg %p50
        %p363 = pneg %p47
        %s364 = sand.u32 %s29, 1
        %s365 = scalar_lea.sflag [#allocation6], %s364
        %s366 = sand.u32 %s63, 1
        %s367 = smul.addr %s366, 16
        %s368 = scalar_lea.vmem [#allocation5], %s367
        %p369 = pneg %p76
        %p370 = pneg %p73
        %p371 = pneg %p97
        %p372 = pneg %p94
        %p373 = pneg %p118
        %p374 = pneg %p115
        %s375 = sand.u32 %s29, 1
        %s376 = scalar_lea.sflag [#allocation6], %s375
        %s377 = sand.u32 %s131, 1
        %s378 = smul.addr %s377, 16
        %s379 = scalar_lea.vmem [#allocation7], %s378
        %p380 = pneg %p144
        %p381 = pneg %p141
        %p382 = pneg %p165
        %p383 = pneg %p162
        %p384 = pneg %p191
        %p385 = pneg %p188
        %s386 = sand.u32 %s29, 1
        %s387 = scalar_lea.sflag [#allocation10], %s386
        %s388 = sand.u32 %s178, 1
        %s389 = smul.addr %s388, 48
        %s390 = scalar_lea.vmem [#allocation9], %s389
        %p391 = pneg %p217
        %p392 = pneg %p214
        %s393 = sand.u32 %s29, 1
        %s394 = scalar_lea.sflag [#allocation10], %s393
        %s395 = sand.u32 %s204, 1
        %s396 = smul.addr %s395, 48
        %s397 = scalar_lea.vmem [#allocation11], %s396
        %s398 = smul.u32 2, %s29
        %s399 = ssub.s32 9, %s398
        %p400 = scmp.lt.s32.totalorder %s399, 2
        %s401 = scalar_select %p400, %s399, 2
        %s402 = smul.u32 128, %s401
        %s403 = smul.u32 2, %s29
        %s404 = ssub.s32 9, %s403
        %p405 = scmp.lt.s32.totalorder %s404, 2
        %s406 = scalar_select %p405, %s404, 2
        %s407 = smul.u32 128, %s406
        %s408 = smul.u32 2, %s29
        %s409 = ssub.s32 9, %s408
        %p410 = scmp.lt.s32.totalorder %s409, 2
        %s411 = scalar_select %p410, %s409, 2
        %s412 = smul.u32 128, %s411
        %s413 = smul.u32 2, %s29
        %s414 = ssub.s32 9, %s413
        %p415 = scmp.lt.s32.totalorder %s414, 2
        %s416 = scalar_select %p415, %s414, 2
        %s417 = smul.u32 128, %s416
        %s418 = smul.u32 %s417, 3
        %s419 = smul.u32 2, %s29
        %s420 = ssub.s32 9, %s419
        %p421 = scmp.lt.s32.totalorder %s420, 2
        %s422 = scalar_select %p421, %s420, 2
        %s423 = smul.u32 128, %s422
        %s424 = smul.u32 %s423, 3
        %p425 = scmp.eq.s32.totalorder %s29, 0
        // Predicated region
        $region53: #{tpu_custom_call.1} parent=39 // pred_check
          %p426 = pneg %p425
        $region54: #{tpu_custom_call.1} parent=39 // pred_check_branch
          %428 = sbr.rel (%p426) target = $region56
        $region55: #{tpu_custom_call.1} parent=39 // pred_region
          %vm429 = vcmask 8192
          %430 = vst.msk [vmem:[#allocation8] sm:$0x1] %vm429, 0.0
        $region56: #{tpu_custom_call.1} parent=39 // pred_fallthru
          _
        %v431 = vld [vmem:[%s334] sm:$0xff]
        %v432 = vld [vmem:[%s334 + $0x8] sm:$0xff]
        %v433 = vld [vmem:[%s343] sm:$0xff]
        %v434 = vld [vmem:[%s343 + $0x8] sm:$0xff]
        %v435 = vsub.f32 %v431, %v433
        %v436 = vsub.f32 %v432, %v434
        %v437 = vld [vmem:[%s2] sm:$0x1]
        %v439 = vlaneseq
        %v440 = vshrl.u32 %v439, 7
        %v441 = vsub.s32 0, %v440
        %v442 = vrot.slane %v437, %v441
        %v444 = vsub.f32 %v431, %v442
        %v445 = vsub.f32 %v432, %v442
        %v446 = vld [vmem:[%s3] sm:$0x1]
        %v448 = vlaneseq
        %v449 = vshrl.u32 %v448, 7
        %v450 = vsub.s32 0, %v449
        %v451 = vrot.slane %v446, %v450
        %v453 = vsub.f32 %v451, %v431
        %v454 = vsub.f32 %v451, %v432
        %v455 = vld [vmem:[%s352] sm:$0xff]
        %v456 = vld [vmem:[%s352 + $0x8] sm:$0xff]
        %v457 = vsub.f32 %v431, %v455
        %v458 = vsub.f32 %v432, %v456
        %v459 = vmax.f32 %v444, 0.0
        %v460 = vmax.f32 %v445, 0.0
        %v461 = vmax.f32 %v453, 0.0
        %v462 = vmax.f32 %v454, 0.0
        %v463 = vand.u32 2147483647, %v457
        %v464 = vand.u32 2147483647, %v458
        %v465 = vmul.f32 %v435, %v435
        %v466 = vmul.f32 %v436, %v436
        %v467 = vmul.f32 %v459, 10.0
        %v468 = vmul.f32 %v460, 10.0
        %v469 = vmul.f32 %v461, 10.0
        %v470 = vmul.f32 %v462, 10.0
        %v471 = vadd.f32 %v467, %v469
        %v472 = vadd.f32 %v468, %v470
        %v473 = vmul.f32 %v463, 100.0
        %v474 = vmul.f32 %v464, 100.0
        %v475 = vadd.f32 %v471, %v473
        %v476 = vadd.f32 %v472, %v474
        %477 = vadd.xlane.f32.xlu0 %v465
        %v478 = vpop.xlane.xlu0 %477
        %479 = vadd.xlane.f32.xlu0 %v466
        %v480 = vpop.xlane.xlu0 %479
        %481 = vadd.xlane.f32.xlu0 %v475
        %v482 = vpop.xlane.xlu0 %481
        %483 = vadd.xlane.f32.xlu0 %v476
        %v484 = vpop.xlane.xlu0 %483
        %v485 = vlaneseq
        %v486 = vshrl.u32 %v485, 7
        %v487 = vadd.s32 %v486, 8
        %s488 = smul.u32 %s29, 16
        %v489 = vstv %s488
        %v490 = vadd.s32 %v486, %v489
        %v491 = vadd.s32 %v487, %v489
        %vm492 = vcmp.lt.s32.totalorder %v490, 72
        %vm493 = vcmp.lt.s32.totalorder %v491, 72
        %v494 = vsel %vm492, %v478, 0.0
        %v495 = vsel %vm493, %v480, 0.0
        %v496 = vsel %vm492, %v482, 0.0
        %v497 = vsel %vm493, %v484, 0.0
        %v498 = vld [vmem:[#allocation8] sm:$0x1]
        %v499 = vadd.f32 %v494, %v495
        %v500 = vrot.slane %v499, 4
        %v501 = vadd.f32 %v499, %v500
        %v502 = vrot.slane %v501, 2
        %v503 = vadd.f32 %v501, %v502
        %v504 = vrot.slane %v503, 1
        %v505 = vadd.f32 %v503, %v504
        %v506 = vadd.f32 %v498, %v505
        %vm507 = vcmask 0
        %508 = vst.msk [vmem:[#allocation8] sm:$0x1] %vm507, %v506
        %v509 = vld [vmem:[#allocation8] sm:$0x1]
        %v510 = vadd.f32 %v496, %v497
        %v511 = vrot.slane %v510, 4
        %v512 = vadd.f32 %v510, %v511
        %v513 = vrot.slane %v512, 2
        %v514 = vadd.f32 %v512, %v513
        %v515 = vrot.slane %v514, 1
        %v516 = vadd.f32 %v514, %v515
        %v517 = vadd.f32 %v509, %v516
        %vm518 = vcmask 8200
        %519 = vst.msk [vmem:[#allocation8] sm:$0x1] %vm518, %v517
        %520 = vst [vmem:[%s390] sm:$0xff] %v444
        %521 = vst [vmem:[%s390 + $0x18] sm:$0xff] %v445
        %522 = vst [vmem:[%s390 + $0x8] sm:$0xff] %v453
        %523 = vst [vmem:[%s390 + $0x20] sm:$0xff] %v454
        %524 = vst [vmem:[%s390 + $0x10] sm:$0xff] %v457
        %525 = vst [vmem:[%s390 + $0x28] sm:$0xff] %v458
        %526 = vst [vmem:[%s397] sm:$0xff] %v459
        %527 = vst [vmem:[%s397 + $0x18] sm:$0xff] %v460
        %528 = vst [vmem:[%s397 + $0x8] sm:$0xff] %v461
        %529 = vst [vmem:[%s397 + $0x20] sm:$0xff] %v462
        %530 = vst [vmem:[%s397 + $0x10] sm:$0xff] %v463
        %531 = vst [vmem:[%s397 + $0x28] sm:$0xff] %v464
        %s532 = sand.u32 %s29, 1
        %s533 = scalar_lea.sflag [#allocation10], %s532
        %s534 = sand.u32 %s178, 1
        %s535 = smul.addr %s534, 48
        %s536 = scalar_lea.vmem [#allocation9], %s535
        %s537 = sand.u32 %s29, 1
        %s538 = scalar_lea.sflag [#allocation10], %s537
        %s539 = sand.u32 %s204, 1
        %s540 = smul.addr %s539, 48
        %s541 = scalar_lea.vmem [#allocation11], %s540
        // Predicated region
        $region57: #{tpu_custom_call.1} parent=39 // pred_check
          %p542 = pneg %p162
        $region58: #{tpu_custom_call.1} parent=39 // pred_check_branch
          %544 = sbr.rel (%p542) target = $region60
        $region59: #{tpu_custom_call.1} parent=39 // pred_region
          %s546 = ssub.s32 16, 16
          %547 = vsyncadd [#allocation4], %s546
          %s549 = sshll.u32 [#allocation8], 4
          %s550 = int_to_ptr.vmem [resolvable:$true] %s549
          %552 = dma.vmem_to_hbm [thread:$0]  %s550, 16, %s5, [#allocation4]
        $region60: #{tpu_custom_call.1} parent=39 // pred_fallthru
          _
        // Predicated region
        $region61: #{tpu_custom_call.1} parent=39 // pred_check
          %p553 = pneg %p188
        $region62: #{tpu_custom_call.1} parent=39 // pred_check_branch
          %555 = sbr.rel (%p553) target = $region64
        $region63: #{tpu_custom_call.1} parent=39 // pred_region
          %s556 = smul.u32 2, %s29
          %s557 = ssub.s32 9, %s556
          %p558 = scmp.lt.s32.totalorder %s557, 2
          %s559 = scalar_select %p558, %s557, 2
          %s560 = smul.u32 128, %s559
          %s561 = smul.u32 %s560, 3
          %s563 = ssub.s32 768, %s561
          %564 = vsyncadd %s533, %s563
          %p565 = scmp.ne.s32.totalorder 0, %s561
          %s566 = smul.addr %s556, 3
          %s567 = smul.addr %s566, 128
          %s568 = scalar_lea.hbm %s6, %s567
          %s569 = smul.u32 24, %s559
          %s570 = sshll.u32 %s536, 4
          %s571 = int_to_ptr.vmem [resolvable:$true] %s570
          %s572 = sshll.u32 %s569, 4
          %576 = dma.vmem_to_hbm [thread:$0]  (%p565), %s571, %s572, %s568, %s533, 384, 384, 24
        $region64: #{tpu_custom_call.1} parent=39 // pred_fallthru
          _
        // Predicated region
        $region65: #{tpu_custom_call.1} parent=39 // pred_check
          %p577 = pneg %p214
        $region66: #{tpu_custom_call.1} parent=39 // pred_check_branch
          %579 = sbr.rel (%p577) target = $region68
        $region67: #{tpu_custom_call.1} parent=39 // pred_region
          %s580 = smul.u32 2, %s29
          %s581 = ssub.s32 9, %s580
          %p582 = scmp.lt.s32.totalorder %s581, 2
          %s583 = scalar_select %p582, %s581, 2
          %s584 = smul.u32 128, %s583
          %s585 = smul.u32 %s584, 3
          %s587 = ssub.s32 768, %s585
          %588 = vsyncadd %s538, %s587
          %p589 = scmp.ne.s32.totalorder 0, %s585
          %s590 = smul.addr %s580, 3
          %s591 = smul.addr %s590, 128
          %s592 = scalar_lea.hbm %s7, %s591
          %s593 = smul.u32 24, %s583
          %s594 = sshll.u32 %s541, 4
          %s595 = int_to_ptr.vmem [resolvable:$true] %s594
          %s596 = sshll.u32 %s593, 4
          %600 = dma.vmem_to_hbm [thread:$0]  (%p589), %s595, %s596, %s592, %s538, 384, 384, 24
        $region68: #{tpu_custom_call.1} parent=39 // pred_fallthru
          _
        // Predicated region
        $region69: #{tpu_custom_call.1} parent=39 // pred_check
          %p601 = pneg %p162
        $region70: #{tpu_custom_call.1} parent=39 // pred_check_branch
          %603 = sbr.rel (%p601) target = $region72
        $region71: #{tpu_custom_call.1} parent=39 // pred_region
          %604 = dma.done [#allocation4], 16
        $region72: #{tpu_custom_call.1} parent=39 // pred_fallthru
          _
      $region40: #{tpu_custom_call.1} parent=5 // pred_fallthru
        _
      %p605 = scmp.le.s32.totalorder 2, %s24
      // Predicated region
      $region73: #{tpu_custom_call.1} parent=5 // pred_check
        %p606 = pneg %p605
      $region74: #{tpu_custom_call.1} parent=5 // pred_check_branch
        %608 = sbr.rel (%p606) target = $region76
      $region75: #{tpu_custom_call.1} parent=5 // pred_region
        %s609 = ssub.s32 %s24, 2
        // Predicated region
        $region77: #{tpu_custom_call.1} parent=75 // pred_check
          %p610 = pneg %p194
        $region78: #{tpu_custom_call.1} parent=75 // pred_check_branch
          %612 = sbr.rel (%p610) target = $region80
        $region79: #{tpu_custom_call.1} parent=75 // pred_region
          %s613 = sand.u32 %s30, 1
          %s614 = scalar_lea.sflag [#allocation10], %s613
          %s615 = sand.u32 %s179, 1
          %s616 = smul.addr %s615, 48
          %s617 = scalar_lea.vmem [#allocation9], %s616
          %618 = dma.done %s614, 768
        $region80: #{tpu_custom_call.1} parent=75 // pred_fallthru
          _
        // Predicated region
        $region81: #{tpu_custom_call.1} parent=75 // pred_check
          %p619 = pneg %p220
        $region82: #{tpu_custom_call.1} parent=75 // pred_check_branch
          %621 = sbr.rel (%p619) target = $region84
        $region83: #{tpu_custom_call.1} parent=75 // pred_region
          %s622 = sand.u32 %s30, 1
          %s623 = scalar_lea.sflag [#allocation10], %s622
          %s624 = sand.u32 %s205, 1
          %s625 = smul.addr %s624, 48
          %s626 = scalar_lea.vmem [#allocation11], %s625
          %627 = dma.done %s623, 768
        $region84: #{tpu_custom_call.1} parent=75 // pred_fallthru
          _
      $region76: #{tpu_custom_call.1} parent=5 // pred_fallthru
        _
    $region6: #{tpu_custom_call.1} parent=1 // loop_footer
      %s28 = sadd.s32 1, %s24
    $region7: #{tpu_custom_call.1} parent=1 // loop_footer_branch
      %23 = sbr.rel target = $region3
    $region8: #{tpu_custom_call.1} parent=1 // loop_exit
      _
    %628 = vsyncpa [#allocation3], 1
    %s629 = scalar_lea.sflag [#allocation3], 1
    %630 = vsyncpa %s629, 1
    %631 = vsyncpa [#allocation6], 1
    %s632 = scalar_lea.sflag [#allocation6], 1
    %633 = vsyncpa %s632, 1
    %634 = vsyncpa [#allocation4], 1
    %s635 = scalar_lea.sflag [#allocation4], 1
    %636 = vsyncpa %s635, 1
    %637 = vsyncpa [#allocation10], 1
    %s638 = scalar_lea.sflag [#allocation10], 1
    %639 = vsyncpa %s638, 1

</llo_original>
